<compile_context>
chip_gen: v7x
topology: tpu7x:2x2x1
jax: 0.10.0
libtpu: 0.0.40
codegen_flags: <defaults>
</compile_context>

<pallas_src>
import jax
import jax.numpy as jnp
from jax.experimental import pallas as pl
from jax.experimental.pallas import tpu as pltpu


def _round_up(n, m):
    return (n + m - 1) // m * m


def mlp_kernel(x_ref, w1_ref, b1_ref, w2_ref, b2_ref, o_ref):
    # x tile: (TM, D_in) bf16 (cast once in the wrapper); f32 MXU accumulation.
    h = jnp.dot(x_ref[...], w1_ref[...],
                preferred_element_type=jnp.float32)            # (TM, H_pad) f32
    h = jnp.maximum(h + b1_ref[...], 0.0)                      # bias + ReLU (VPU)
    y = jnp.dot(h.astype(jnp.bfloat16), w2_ref[...],
                preferred_element_type=jnp.float32)            # (TM, O_pad) f32
    y = y + b2_ref[...]
    # sigmoid(y) == 0.5 * (tanh(y/2) + 1): one EUP op, no approx-recip error.
    o_ref[...] = (0.5 * (jnp.tanh(0.5 * y) + 1.0)).astype(o_ref.dtype)


def prepare_params(w1, b1, w2, b2):
    """One-time parameter prep: pad feature dims to 128 lanes, cast to bf16.

    Weights are stored as (in, out), i.e. transposed vs. PyTorch's (out, in).
    Zero padding keeps the math exact (padded hidden units contribute 0,
    padded output columns are sliced off in the wrapper).
    """
    d_in, hidden = w1.shape
    d_out = w2.shape[1]
    h_pad = _round_up(hidden, 128)
    o_pad = _round_up(d_out, 128)
    w1p = jnp.zeros((d_in, h_pad), jnp.bfloat16).at[:, :hidden].set(
        w1.astype(jnp.bfloat16))
    b1p = jnp.zeros((1, h_pad), jnp.float32).at[:, :hidden].set(
        b1.reshape(1, -1).astype(jnp.float32))
    w2p = jnp.zeros((h_pad, o_pad), jnp.bfloat16).at[:hidden, :d_out].set(
        w2.astype(jnp.bfloat16))
    b2p = jnp.zeros((1, o_pad), jnp.float32).at[:, :d_out].set(
        b2.reshape(1, -1).astype(jnp.float32))
    return (w1p, b1p, w2p, b2p), d_out


def mlp_forward(x, params, d_out, *, tm_max=1024):
    """x: (B, D_in) float; params from prepare_params(). Returns (B, d_out) f32."""
    w1p, b1p, w2p, b2p = params
    B, d_in = x.shape
    h_pad = w1p.shape[1]
    o_pad = w2p.shape[1]

    # Batch tiling: cover B with ceil(B / tm_max) tiles, tile rounded up to 16
    # rows (bf16 sublane packing). The last block may be ragged; Pallas masks
    # OOB rows on the output writeback, so no jnp.pad of x is needed.
    n_tiles = pl.cdiv(B, tm_max)
    tm = _round_up(pl.cdiv(B, n_tiles), 16)
    grid = (pl.cdiv(B, tm),)

    # Stream activations as bf16 (the MXU inputs are bf16 anyway).
    xp = x.astype(jnp.bfloat16)

    # VMEM budget: double-buffered x/out tiles + single-copy resident weights
    # + in-kernel f32/bf16 intermediates, with 1.5x margin; clamp to
    # [16 MiB, 48 MiB] (overrides v5e's 16 MiB scoped default, leaves
    # headroom under v7x's 64 MiB physical VMEM).
    vmem_need = (
        2 * tm * d_in * 2                        # x tiles (bf16, double-buffered)
        + 2 * tm * o_pad * 4                     # out tiles (f32, double-buffered)
        + (d_in * h_pad + h_pad * o_pad) * 2     # resident bf16 weights (1 copy)
        + (h_pad + o_pad) * 4                    # resident f32 biases
        + tm * h_pad * (4 + 2)                   # h (f32) + bf16 copy of h
        + 2 * tm * o_pad * 4                     # y / sigmoid f32 temporaries
    )
    vmem_limit = int(min(max(int(vmem_need * 1.5), 16 << 20), 48 << 20))

    out = pl.pallas_call(
        mlp_kernel,
        out_shape=jax.ShapeDtypeStruct((B, o_pad), jnp.float32),
        grid=grid,
        in_specs=[
            # x is the only streamed operand. (On v7x, sweeping
            # pipeline_mode=pl.Buffered(3) here can help hide DMA.)
            pl.BlockSpec((tm, d_in), lambda i: (i, 0)),
            # Resident operands: whole array in VMEM, single copy (not pipelined).
            pl.BlockSpec(memory_space=pltpu.MemorySpace.VMEM),
            pl.BlockSpec(memory_space=pltpu.MemorySpace.VMEM),
            pl.BlockSpec(memory_space=pltpu.MemorySpace.VMEM),
            pl.BlockSpec(memory_space=pltpu.MemorySpace.VMEM),
        ],
        out_specs=pl.BlockSpec((tm, o_pad), lambda i: (i, 0)),
        compiler_params=pltpu.CompilerParams(
            dimension_semantics=("parallel",),
            vmem_limit_bytes=vmem_limit),
    )(xp, w1p, b1p, w2p, b2p)

    # Kernel writes a lane-dense (tm, 128) f32 slab; slice off the padded
    # output columns here. (If the consumer tolerates bf16 or the padded slab,
    # fold this slice / the dtype into it to save an HBM pass.)
    return out[:, :d_out]


def init_params(key, input_dim, output_dim, hidden=64, dtype=jnp.float32):
    """Deterministic init mimicking nn.Linear's U(-1/sqrt(fan_in), 1/sqrt(fan_in))."""
    k1, k2, k3, k4 = jax.random.split(key, 4)
    bound1 = 1.0 / (input_dim ** 0.5)
    bound2 = 1.0 / (hidden ** 0.5)
    # Stored as (in, out) so the kernel does x @ W directly.
    w1 = jax.random.uniform(k1, (input_dim, hidden), dtype, -bound1, bound1)
    b1 = jax.random.uniform(k2, (hidden,), dtype, -bound1, bound1)
    w2 = jax.random.uniform(k3, (hidden, output_dim), dtype, -bound2, bound2)
    b2 = jax.random.uniform(k4, (output_dim,), dtype, -bound2, bound2)
    return w1, b1, w2, b2


if __name__ == "__main__":
    key = jax.random.PRNGKey(0)
    batch, input_dim, output_dim = 8, 32, 16

    kx, kp = jax.random.split(key)
    x = jax.random.normal(kx, (batch, input_dim), jnp.float32)
    w1, b1, w2, b2 = init_params(kp, input_dim, output_dim)

    params, d_out = prepare_params(w1, b1, w2, b2)   # one-time prep, not per call
    out = mlp_forward(x, params, d_out)
    out = jax.block_until_ready(out)
    assert out.shape == (batch, output_dim)

    # Reference 1: pure-JAX with the same bf16-input / f32-accumulate matmuls
    # as the kernel (tight check).
    xb = x.astype(jnp.bfloat16)
    h_bf = jnp.dot(xb, w1.astype(jnp.bfloat16),
                   preferred_element_type=jnp.float32) + b1.reshape(1, -1)
    h_bf = jnp.maximum(h_bf, 0.0)
    y_bf = jnp.dot(h_bf.astype(jnp.bfloat16), w2.astype(jnp.bfloat16),
                   preferred_element_type=jnp.float32) + b2.reshape(1, -1)
    ref_bf = jax.nn.sigmoid(y_bf)
    assert jnp.allclose(out, ref_bf, atol=2e-3, rtol=2e-3)

    # Reference 2: full-f32 PyTorch-semantics forward (loose check; the delta
    # comes from the bf16 MXU inputs, which is expected and documented).
    h32 = jnp.maximum(x @ w1 + b1.reshape(1, -1), 0.0)
    ref32 = jax.nn.sigmoid(h32 @ w2 + b2.reshape(1, -1))
    assert jnp.allclose(out, ref32, atol=2e-2)

    print("KERNEL_OK")
</pallas_src>

<mosaic_0001>
module attributes {stable_mosaic.version = 11 : i64} {
  func.func @mlp_kernel(%arg0: i32, %arg1: memref<16x32xbf16, #tpu.memory_space<vmem>>, %arg2: memref<32x128xbf16, #tpu.memory_space<vmem>>, %arg3: memref<1x128xf32, #tpu.memory_space<vmem>>, %arg4: memref<128x128xbf16, #tpu.memory_space<vmem>>, %arg5: memref<1x128xf32, #tpu.memory_space<vmem>>, %arg6: memref<16x128xf32, #tpu.memory_space<vmem>>) attributes {dimension_semantics = [#tpu.dimension_semantics<parallel>], iteration_bounds = array<i64: 1>, scalar_prefetch = 0 : i64, scratch_operands = 0 : i64, tpu.core_type = #tpu.core_type<tc>, window_params = [{transform_indices = @transform_0, window_bounds = array<i64: 16, 32>}, {pipeline_mode = #tpu.pipeline_mode<synchronous>, transform_indices = @transform_1, window_bounds = array<i64: 32, 128>}, {pipeline_mode = #tpu.pipeline_mode<synchronous>, transform_indices = @transform_2, window_bounds = array<i64: 1, 128>}, {pipeline_mode = #tpu.pipeline_mode<synchronous>, transform_indices = @transform_3, window_bounds = array<i64: 128, 128>}, {pipeline_mode = #tpu.pipeline_mode<synchronous>, transform_indices = @transform_4, window_bounds = array<i64: 1, 128>}, {transform_indices = @transform_5, window_bounds = array<i64: 16, 128>}]} {
    %c0 = arith.constant 0 : index
    %c0_0 = arith.constant 0 : index
    %0 = vector.load %arg1[%c0, %c0_0] : memref<16x32xbf16, #tpu.memory_space<vmem>>, vector<16x32xbf16>
    %c0_1 = arith.constant 0 : index
    %c0_2 = arith.constant 0 : index
    %1 = vector.load %arg2[%c0_1, %c0_2] : memref<32x128xbf16, #tpu.memory_space<vmem>>, vector<32x128xbf16>
    %cst = arith.constant dense<0.000000e+00> : vector<16x128xf32>
    %2 = tpu.matmul %0, %1, %cst {dimension_numbers = #tpu.dot_dimension_numbers<[1], [0], [0], [1], [0, 0, 1, 1], [], []>} : vector<16x32xbf16>, vector<32x128xbf16>, vector<16x128xf32> -> vector<16x128xf32>
    %c0_3 = arith.constant 0 : index
    %c0_4 = arith.constant 0 : index
    %3 = vector.load %arg3[%c0_3, %c0_4] : memref<1x128xf32, #tpu.memory_space<vmem>>, vector<1x128xf32>
    %4 = vector.broadcast %3 : vector<1x128xf32> to vector<16x128xf32>
    %5 = arith.addf %2, %4 : vector<16x128xf32>
    %cst_5 = arith.constant 0.000000e+00 : f32
    %6 = vector.broadcast %cst_5 : f32 to vector<16x128xf32>
    %7 = arith.maximumf %5, %6 : vector<16x128xf32>
    %8 = arith.truncf %7 : vector<16x128xf32> to vector<16x128xbf16>
    %c0_6 = arith.constant 0 : index
    %c0_7 = arith.constant 0 : index
    %9 = vector.load %arg4[%c0_6, %c0_7] : memref<128x128xbf16, #tpu.memory_space<vmem>>, vector<128x128xbf16>
    %cst_8 = arith.constant dense<0.000000e+00> : vector<16x128xf32>
    %10 = tpu.matmul %8, %9, %cst_8 {dimension_numbers = #tpu.dot_dimension_numbers<[1], [0], [0], [1], [0, 0, 1, 1], [], []>} : vector<16x128xbf16>, vector<128x128xbf16>, vector<16x128xf32> -> vector<16x128xf32>
    %c0_9 = arith.constant 0 : index
    %c0_10 = arith.constant 0 : index
    %11 = vector.load %arg5[%c0_9, %c0_10] : memref<1x128xf32, #tpu.memory_space<vmem>>, vector<1x128xf32>
    %12 = vector.broadcast %11 : vector<1x128xf32> to vector<16x128xf32>
    %13 = arith.addf %10, %12 : vector<16x128xf32>
    %cst_11 = arith.constant 5.000000e-01 : f32
    %14 = vector.broadcast %cst_11 : f32 to vector<16x128xf32>
    %15 = arith.mulf %14, %13 : vector<16x128xf32>
    %16 = math.tanh %15 : vector<16x128xf32>
    %cst_12 = arith.constant 1.000000e+00 : f32
    %17 = vector.broadcast %cst_12 : f32 to vector<16x128xf32>
    %18 = arith.addf %16, %17 : vector<16x128xf32>
    %cst_13 = arith.constant 5.000000e-01 : f32
    %19 = vector.broadcast %cst_13 : f32 to vector<16x128xf32>
    %20 = arith.mulf %19, %18 : vector<16x128xf32>
    %c0_14 = arith.constant 0 : index
    %c0_15 = arith.constant 0 : index
    %21 = vector.load %arg6[%c0_14, %c0_15] : memref<16x128xf32, #tpu.memory_space<vmem>>, vector<16x128xf32>
    tpu.vector_store %arg6[%c0_14, %c0_15], %20 {strides = array<i32>} : memref<16x128xf32, #tpu.memory_space<vmem>>, vector<16x128xf32>,
    return
  }
  func.func @transform_0(%arg0: i32) -> (i32, i32) {
    %c0_i32 = arith.constant 0 : i32
    %c0_i32_0 = arith.constant 0 : i32
    return %arg0, %c0_i32 : i32, i32
  }
  func.func @transform_1(%arg0: i32) -> (i32, i32) {
    %c0_i32 = arith.constant 0 : i32
    %c0_i32_0 = arith.constant 0 : i32
    %c0_i32_1 = arith.constant 0 : i32
    return %c0_i32, %c0_i32_0 : i32, i32
  }
  func.func @transform_2(%arg0: i32) -> (i32, i32) {
    %c0_i32 = arith.constant 0 : i32
    %c0_i32_0 = arith.constant 0 : i32
    %c0_i32_1 = arith.constant 0 : i32
    return %c0_i32, %c0_i32_0 : i32, i32
  }
  func.func @transform_3(%arg0: i32) -> (i32, i32) {
    %c0_i32 = arith.constant 0 : i32
    %c0_i32_0 = arith.constant 0 : i32
    %c0_i32_1 = arith.constant 0 : i32
    return %c0_i32, %c0_i32_0 : i32, i32
  }
  func.func @transform_4(%arg0: i32) -> (i32, i32) {
    %c0_i32 = arith.constant 0 : i32
    %c0_i32_0 = arith.constant 0 : i32
    %c0_i32_1 = arith.constant 0 : i32
    return %c0_i32, %c0_i32_0 : i32, i32
  }
  func.func @transform_5(%arg0: i32) -> (i32, i32) {
    %c0_i32 = arith.constant 0 : i32
    %c0_i32_0 = arith.constant 0 : i32
    return %arg0, %c0_i32 : i32, i32
  }
}

</mosaic_0001>

<llo_original>
// kernel: tpu_custom_call.1
$region0: #{tpu_custom_call.1}
  #allocation0 [shape = 'u32[]', space=smem, size = 0x4, offset = 0x4, fixed_abs, tag = 'smem constant byte address 0x4 - core index']
  #allocation1 [shape = 'u32[144,128]{1,0:T(1,128)}', space=vmem, size = 0x12000, scoped, tag = 'internal scratch']
  %s0 = inlined_call_operand.hbm [shape: bf16[8,32], index: 0, kind: input, shape index: {}]
  %s1 = inlined_call_operand.hbm [shape: bf16[32,128], index: 1, kind: input, shape index: {}]
  %s2 = inlined_call_operand.vmem [shape: f32[1,128], index: 2, kind: input, shape index: {}]
  %s3 = inlined_call_operand.hbm [shape: bf16[128,128], index: 3, kind: input, shape index: {}]
  %s4 = inlined_call_operand.vmem [shape: f32[1,128], index: 4, kind: input, shape index: {}]
  %s5 = inlined_call_operand.hbm [shape: f32[8,128], index: 5, kind: output, shape index: {}]
  %s6 = sld [smem:[#allocation0]]
  $region42: #{tpu_custom_call.1} parent=0
    _
  %s8 = ssub.s32 1, %s6
  %s9 = scalar_select 0, %s8, %s6
  $region1: #{tpu_custom_call.1} parent=0
    #allocation2 [shape = 'u8[4096]{0}', space=vmem, size = 0x1000, scoped, tag = 'input window, operand 0, single buffered']
    #allocation3 [shape = 's32[1]{0}', space=sflag, size = 0x4, scoped, tag = 'scoped memory for tpu_custom_call.1']
    #allocation4 [shape = 's32[1]{0}', space=sflag, size = 0x4, scoped, tag = 'scoped memory for tpu_custom_call.1']
    #allocation5 [shape = 'u8[8192]{0}', space=vmem, size = 0x2000, scoped, tag = 'input window, operand 1, single buffered']
    #allocation6 [shape = 's32[1]{0}', space=sflag, size = 0x4, scoped, tag = 'scoped memory for tpu_custom_call.1']
    #allocation7 [shape = 'u8[32768]{0}', space=vmem, size = 0x8000, scoped, tag = 'input window, operand 3, single buffered']
    #allocation8 [shape = 'u8[8192]{0}', space=vmem, size = 0x2000, scoped, tag = 'output window, operand 0, single buffered']
    %10 = vsyncpa [#allocation3], 0
    %11 = vsyncpa [#allocation6], 0
    %12 = vsyncpa [#allocation4], 0
    // Predicated region
    $region2: #{tpu_custom_call.1} parent=1 // pred_check
      _
    $region3: #{tpu_custom_call.1} parent=1 // pred_check_branch
      %14 = sbr.rel (0) target = $region5
    $region4: #{tpu_custom_call.1} parent=1 // pred_region
      %s16 = ssub.s32 128, 64
      %17 = vsyncadd [#allocation3], %s16
      %s18 = sshll.u32 [#allocation2], 4
      %s19 = int_to_ptr.vmem [resolvable:$true] %s18
      %24 = dma.hbm_to_vmem [thread:$0]  %s0, 64, %s19, [#allocation3], 64, 64, 4
    $region5: #{tpu_custom_call.1} parent=1 // pred_fallthru
      _
    // Predicated region
    $region6: #{tpu_custom_call.1} parent=1 // pred_check
      _
    $region7: #{tpu_custom_call.1} parent=1 // pred_check_branch
      %26 = sbr.rel (0) target = $region9
    $region8: #{tpu_custom_call.1} parent=1 // pred_region
      %s28 = ssub.s32 256, 256
      %29 = vsyncadd [#allocation6], %s28
      %s30 = sshll.u32 [#allocation5], 4
      %s31 = int_to_ptr.vmem [resolvable:$true] %s30
      %36 = dma.hbm_to_vmem [thread:$0]  %s1, 256, %s31, [#allocation6], 64, 64, 4
    $region9: #{tpu_custom_call.1} parent=1 // pred_fallthru
      _
    // Predicated region
    $region10: #{tpu_custom_call.1} parent=1 // pred_check
      _
    $region11: #{tpu_custom_call.1} parent=1 // pred_check_branch
      %38 = sbr.rel (0) target = $region13
    $region12: #{tpu_custom_call.1} parent=1 // pred_region
      _
    $region13: #{tpu_custom_call.1} parent=1 // pred_fallthru
      _
    // Predicated region
    $region14: #{tpu_custom_call.1} parent=1 // pred_check
      _
    $region15: #{tpu_custom_call.1} parent=1 // pred_check_branch
      %40 = sbr.rel (0) target = $region17
    $region16: #{tpu_custom_call.1} parent=1 // pred_region
      %s42 = ssub.s32 1024, 1024
      %43 = vsyncadd [#allocation6], %s42
      %s44 = sshll.u32 [#allocation7], 4
      %s45 = int_to_ptr.vmem [resolvable:$true] %s44
      %50 = dma.hbm_to_vmem [thread:$0]  %s3, 1024, %s45, [#allocation6], 64, 64, 4
    $region17: #{tpu_custom_call.1} parent=1 // pred_fallthru
      _
    // Predicated region
    $region18: #{tpu_custom_call.1} parent=1 // pred_check
      _
    $region19: #{tpu_custom_call.1} parent=1 // pred_check_branch
      %52 = sbr.rel (0) target = $region21
    $region20: #{tpu_custom_call.1} parent=1 // pred_region
      _
    $region21: #{tpu_custom_call.1} parent=1 // pred_fallthru
      _
    // Predicated region
    $region22: #{tpu_custom_call.1} parent=1 // pred_check
      _
    $region23: #{tpu_custom_call.1} parent=1 // pred_check_branch
      %54 = sbr.rel (0) target = $region25
    $region24: #{tpu_custom_call.1} parent=1 // pred_region
      %55 = dma.done [#allocation3], 128
    $region25: #{tpu_custom_call.1} parent=1 // pred_fallthru
      _
    // Predicated region
    $region26: #{tpu_custom_call.1} parent=1 // pred_check
      _
    $region27: #{tpu_custom_call.1} parent=1 // pred_check_branch
      %57 = sbr.rel (0) target = $region29
    $region28: #{tpu_custom_call.1} parent=1 // pred_region
      %58 = dma.done [#allocation6], 256
    $region29: #{tpu_custom_call.1} parent=1 // pred_fallthru
      _
    // Predicated region
    $region30: #{tpu_custom_call.1} parent=1 // pred_check
      _
    $region31: #{tpu_custom_call.1} parent=1 // pred_check_branch
      %60 = sbr.rel (0) target = $region33
    $region32: #{tpu_custom_call.1} parent=1 // pred_region
      %61 = dma.done [#allocation6], 1024
    $region33: #{tpu_custom_call.1} parent=1 // pred_fallthru
      _
    %v63 = vld [vmem:[#allocation2] sm:$0xf]
    %v64 = vld [vmem:[#allocation2 + $0x4] sm:$0xf]
    %v65 = vld [vmem:[#allocation5] sm:$0xf]
    %v66 = vld [vmem:[#allocation5 + $0x4] sm:$0xf]
    %v67 = vld [vmem:[#allocation5 + $0x8] sm:$0xf]
    %v68 = vld [vmem:[#allocation5 + $0xc] sm:$0xf]
    %v69 = vld [vmem:[%s2] sm:$0x1]
    %v71 = vlaneseq
    %v72 = vshrl.u32 %v71, 7
    %v73 = vsub.s32 0, %v72
    %v74 = vrot.slane %v69, %v73
    %v78 = vunpack.c.l.b16 %v63
    %v79 = vunpack.c.l.b16 %v64
    %v80 = vpack.c.b16 %v79, %v78
    %v85 = vunpack.c.l.b16 %v65
    %v86 = vunpack.c.l.b16 %v66
    %v87 = vunpack.c.l.b16 %v67
    %v88 = vunpack.c.l.b16 %v68
    %v89 = vpack.c.b16 %v86, %v85
    %v90 = vpack.c.b16 %v88, %v87
    %vm93 = vcmask 261120
    %v95 = vsel %vm93, %v80, 0
    %97 = vmatprep.subr.bf16.mxu0 0
    %98 = vmatpush1.bf16.msra.mxu0 %v89
    %99 = vmatprep.subr.bf16.mxu0 0
    %100 = vmatpush1.bf16.msra.mxu0 %v90
    %101 = vmatprep.subr.bf16.mxu0 0
    %102 = vmatpush1.bf16.msra.mxu0 0
    %103 = vmatprep.subr.bf16.mxu0 0
    %104 = vmatpush1.bf16.msra.mxu0 0
    %105 = vmatprep.subr.bf16.mxu0 0
    %106 = vmatpush1.bf16.msra.mxu0 0
    %107 = vmatprep.subr.bf16.mxu0 0
    %108 = vmatpush1.bf16.msra.mxu0 0
    %109 = vmatprep.subr.bf16.mxu0 0
    %110 = vmatpush1.bf16.msra.mxu0 0
    %111 = vmatprep.subr.bf16.mxu0 0
    %112 = vmatpush1.bf16.msra.mxu0 0
    %113 = vmatprep.subr.bf16.mxu0 0
    %114 = vmatpush1.bf16.msra.mxu0 0
    %115 = vmatprep.subr.bf16.mxu0 0
    %116 = vmatpush1.bf16.msra.mxu0 0
    %117 = vmatprep.subr.bf16.mxu0 0
    %118 = vmatpush1.bf16.msra.mxu0 0
    %119 = vmatprep.subr.bf16.mxu0 0
    %120 = vmatpush1.bf16.msra.mxu0 0
    %121 = vmatprep.subr.bf16.mxu0 0
    %122 = vmatpush1.bf16.msra.mxu0 0
    %123 = vmatprep.subr.bf16.mxu0 0
    %124 = vmatpush1.bf16.msra.mxu0 0
    %125 = vmatprep.subr.bf16.mxu0 0
    %126 = vmatpush1.bf16.msra.mxu0 0
    %127 = vmatprep.subr.bf16.mxu0 0
    %128 = vmatpush1.bf16.msra.mxu0 0
    %129 = vmatprep.mubr.bf16.mxu0 0
    %130 = vmatmul.mubr.bf16.gmra.mrb[0].mxu0 %v95
    %v131 = vpop.f32.mrb[0].mxu0
    %v132 = vadd.f32 %v74, %v131
    %v133 = vpop.f32.mrb[0].mxu0
    %v134 = vpop.f32.mrb[0].mxu0
    %v135 = vadd.f32 %v74, %v134
    %v136 = vpop.f32.mrb[0].mxu0
    %137 = vdwg.mxu0
    %v138 = vmax.f32 %v132, 0.0
    %v139 = vmax.f32 %v135, 0.0
    %v140 = vpack.c.bf16 %v139, %v138
    %v141 = vld [vmem:[#allocation7] sm:$0xf]
    %v142 = vld [vmem:[#allocation7 + $0x4] sm:$0xf]
    %v143 = vld [vmem:[#allocation7 + $0x8] sm:$0xf]
    %v144 = vld [vmem:[#allocation7 + $0xc] sm:$0xf]
    %v145 = vld [vmem:[#allocation7 + $0x10] sm:$0xf]
    %v146 = vld [vmem:[#allocation7 + $0x14] sm:$0xf]
    %v147 = vld [vmem:[#allocation7 + $0x18] sm:$0xf]
    %v148 = vld [vmem:[#allocation7 + $0x1c] sm:$0xf]
    %v149 = vld [vmem:[#allocation7 + $0x20] sm:$0xf]
    %v150 = vld [vmem:[#allocation7 + $0x24] sm:$0xf]
    %v151 = vld [vmem:[#allocation7 + $0x28] sm:$0xf]
    %v152 = vld [vmem:[#allocation7 + $0x2c] sm:$0xf]
    %v153 = vld [vmem:[#allocation7 + $0x30] sm:$0xf]
    %v154 = vld [vmem:[#allocation7 + $0x34] sm:$0xf]
    %v155 = vld [vmem:[#allocation7 + $0x38] sm:$0xf]
    %v156 = vld [vmem:[#allocation7 + $0x3c] sm:$0xf]
    %v157 = vld [vmem:[%s4] sm:$0x1]
    %v159 = vlaneseq
    %v160 = vshrl.u32 %v159, 7
    %v161 = vsub.s32 0, %v160
    %v162 = vrot.slane %v157, %v161
    %v180 = vunpack.c.l.b16 %v141
    %v181 = vunpack.c.l.b16 %v142
    %v182 = vunpack.c.l.b16 %v143
    %v183 = vunpack.c.l.b16 %v144
    %v184 = vunpack.c.l.b16 %v145
    %v185 = vunpack.c.l.b16 %v146
    %v186 = vunpack.c.l.b16 %v147
    %v187 = vunpack.c.l.b16 %v148
    %v188 = vunpack.c.l.b16 %v149
    %v189 = vunpack.c.l.b16 %v150
    %v190 = vunpack.c.l.b16 %v151
    %v191 = vunpack.c.l.b16 %v152
    %v192 = vunpack.c.l.b16 %v153
    %v193 = vunpack.c.l.b16 %v154
    %v194 = vunpack.c.l.b16 %v155
    %v195 = vunpack.c.l.b16 %v156
    %v196 = vpack.c.b16 %v181, %v180
    %v197 = vpack.c.b16 %v183, %v182
    %v198 = vpack.c.b16 %v185, %v184
    %v199 = vpack.c.b16 %v187, %v186
    %v200 = vpack.c.b16 %v189, %v188
    %v201 = vpack.c.b16 %v191, %v190
    %v202 = vpack.c.b16 %v193, %v192
    %v203 = vpack.c.b16 %v195, %v194
    %212 = vmatprep.subr.bf16.mxu0 0
    %213 = vmatpush1.bf16.msra.mxu0 %v196
    %214 = vmatprep.subr.bf16.mxu0 0
    %215 = vmatpush1.bf16.msra.mxu0 %v197
    %216 = vmatprep.subr.bf16.mxu0 0
    %217 = vmatpush1.bf16.msra.mxu0 %v198
    %218 = vmatprep.subr.bf16.mxu0 0
    %219 = vmatpush1.bf16.msra.mxu0 %v199
    %220 = vmatprep.subr.bf16.mxu0 0
    %221 = vmatpush1.bf16.msra.mxu0 %v200
    %222 = vmatprep.subr.bf16.mxu0 0
    %223 = vmatpush1.bf16.msra.mxu0 %v201
    %224 = vmatprep.subr.bf16.mxu0 0
    %225 = vmatpush1.bf16.msra.mxu0 %v202
    %226 = vmatprep.subr.bf16.mxu0 0
    %227 = vmatpush1.bf16.msra.mxu0 %v203
    %228 = vmatprep.subr.bf16.mxu0 0
    %229 = vmatpush1.bf16.msra.mxu0 0
    %230 = vmatprep.subr.bf16.mxu0 0
    %231 = vmatpush1.bf16.msra.mxu0 0
    %232 = vmatprep.subr.bf16.mxu0 0
    %233 = vmatpush1.bf16.msra.mxu0 0
    %234 = vmatprep.subr.bf16.mxu0 0
    %235 = vmatpush1.bf16.msra.mxu0 0
    %236 = vmatprep.subr.bf16.mxu0 0
    %237 = vmatpush1.bf16.msra.mxu0 0
    %238 = vmatprep.subr.bf16.mxu0 0
    %239 = vmatpush1.bf16.msra.mxu0 0
    %240 = vmatprep.subr.bf16.mxu0 0
    %241 = vmatpush1.bf16.msra.mxu0 0
    %242 = vmatprep.subr.bf16.mxu0 0
    %243 = vmatpush1.bf16.msra.mxu0 0
    %244 = vmatprep.mubr.bf16.mxu0 0
    %245 = vmatmul.mubr.bf16.gmra.mrb[0].mxu0 %v140
    %v246 = vpop.f32.mrb[0].mxu0
    %v247 = vadd.f32 %v162, %v246
    %v248 = vpop.f32.mrb[0].mxu0
    %v249 = vpop.f32.mrb[0].mxu0
    %v250 = vadd.f32 %v162, %v249
    %v251 = vpop.f32.mrb[0].mxu0
    %252 = vdwg.mxu0
    %v253 = vmul.f32 %v247, 0.5
    %v254 = vmul.f32 %v250, 0.5
    %v255 = vtanh.pop %v253
    %v256 = vtanh.pop %v254
    %v257 = vadd.f32 %v255, 1.0
    %v258 = vadd.f32 %v256, 1.0
    %v259 = vmul.f32 %v257, 0.5
    %v260 = vmul.f32 %v258, 0.5
    %261 = vst [vmem:[#allocation8] sm:$0xff] %v259
    %262 = vst [vmem:[#allocation8 + $0x8] sm:$0xff] %v260
    // Predicated region
    $region34: #{tpu_custom_call.1} parent=1 // pred_check
      _
    $region35: #{tpu_custom_call.1} parent=1 // pred_check_branch
      %264 = sbr.rel (0) target = $region37
    $region36: #{tpu_custom_call.1} parent=1 // pred_region
      %s266 = ssub.s32 256, 128
      %267 = vsyncadd [#allocation4], %s266
      %s268 = sshll.u32 [#allocation8], 4
      %s269 = int_to_ptr.vmem [resolvable:$true] %s268
      %274 = dma.vmem_to_hbm [thread:$0]  %s269, 128, %s5, [#allocation4], 128, 128, 8
    $region37: #{tpu_custom_call.1} parent=1 // pred_fallthru
      _
    // Predicated region
    $region38: #{tpu_custom_call.1} parent=1 // pred_check
      _
    $region39: #{tpu_custom_call.1} parent=1 // pred_check_branch
      %276 = sbr.rel (0) target = $region41
    $region40: #{tpu_custom_call.1} parent=1 // pred_region
      %277 = dma.done [#allocation4], 256
    $region41: #{tpu_custom_call.1} parent=1 // pred_fallthru
      _
    %278 = vsyncpa [#allocation3], 1
    %279 = vsyncpa [#allocation6], 1
    %280 = vsyncpa [#allocation4], 1

</llo_original>
